<compile_context>
chip_gen: v7x
topology: tpu7x:2x2x1
jax: 0.10.0
libtpu: 0.0.40
codegen_flags: <defaults>
</compile_context>

<pallas_src>
import functools

import jax
import jax.numpy as jnp
from jax.experimental import pallas as pl
from jax.experimental.pallas import tpu as pltpu


# ---------------------------------------------------------------------------
# Kernels
# ---------------------------------------------------------------------------

def _aftermath_kernel_scaled(x_ref, s_ref, o_ref, *, add_val, act_fn):
    """out = act((x + add_val) * s); s is an f32 (TM,1) column or (1,TN) row."""
    net = x_ref[...]
    if add_val is not None:
        net = net + jnp.asarray(add_val, net.dtype)
    # Keep the scale in f32; the multiply promotes, only the store downcasts.
    net = net.astype(jnp.float32) * s_ref[...]
    if act_fn is not None:
        net = act_fn(net)
    o_ref[...] = net.astype(o_ref.dtype)


def _aftermath_kernel_plain(x_ref, o_ref, *, add_val, act_fn):
    """out = act(x + add_val) (no per-channel scale input at all)."""
    net = x_ref[...]
    if add_val is not None:
        net = net + jnp.asarray(add_val, net.dtype)
    if act_fn is not None:
        net = act_fn(net)
    o_ref[...] = net.astype(o_ref.dtype)


# ---------------------------------------------------------------------------
# Tiling policy
# ---------------------------------------------------------------------------

_LANE = 128
_TN_CAP = 8192
_SPLIT_THRESHOLD_BYTES = 2 * 1024 * 1024


def _round_up(x, m):
    return ((x + m - 1) // m) * m


def _round_down(x, m):
    return (x // m) * m


def _sublane_multiple(itemsize):
    # f32 -> 8, bf16/f16 -> 16, int8/fp8 -> 32 (sub-32-bit dtypes pack sublanes)
    return 8 * max(1, 4 // itemsize)


def _data_budget_bytes():
    """Budget for the 4 double-buffered data blocks (2x in + 2x out)."""
    kind = ""
    try:
        kind = jax.devices()[0].device_kind.lower()
    except Exception:  # pragma: no cover - defensive
        pass
    if "v7" in kind:
        # Higher HBM BW on v7x -> amortize per-step overhead with bigger blocks
        # (still well under the 32 MiB scoped default / 64 MiB physical VMEM).
        return 20 * 1024 * 1024
    # Safe everywhere (v5e's scoped default is only 16 MiB); 2 MiB blocks are
    # already past the HBM-roofline knee on v5e/v6e.
    return 8 * 1024 * 1024


def _choose_tiles(rows, cols, itemsize, budget):
    """Pick (TM, TN): TN is a multiple of 128 (lane-dense stores; only the last
    column block may be masked), TM is a dtype-aware sublane multiple or the
    full row extent, and 4 * TM * TN * itemsize <= budget."""
    sub = _sublane_multiple(itemsize)
    cols128 = _round_up(cols, _LANE)
    tn = min(cols128, _TN_CAP)
    max_rows = budget // (4 * tn * itemsize)
    if max_rows >= rows:
        tm = rows                                     # full extent: always legal
        # Rows exhausted: spend leftover budget on wider lane tiles.
        tn = min(cols128,
                 max(tn, _round_down(budget // (4 * max(tm, 1) * itemsize), _LANE)))
    elif max_rows >= sub:
        tm = _round_down(max_rows, sub)
    else:
        tm = sub
        tn = max(_LANE, _round_down(budget // (4 * sub * itemsize), _LANE))
    return tm, tn


def _ensure_grid_splits(tm, tn, rows, cols, itemsize):
    """Guarantee >= 2 grid steps for mid/large tensors so the 'parallel' axes
    can be sharded across v7x's 2 TensorCores (harmless on v5e/v6e)."""
    if rows * cols * itemsize < _SPLIT_THRESHOLD_BYTES:
        return tm, tn
    if pl.cdiv(rows, tm) * pl.cdiv(cols, tn) >= 2:
        return tm, tn
    sub = _sublane_multiple(itemsize)
    if rows > sub:                      # prefer splitting rows: keeps lanes dense
        tm = max(sub, _round_down(pl.cdiv(rows, 2), sub))
    elif tn >= 2 * _LANE:
        tn = max(_LANE, _round_down(tn // 2, _LANE))
    return tm, tn


def _vmem_limit_bytes(tm, tn, itemsize, scale_block_bytes):
    data = 4 * tm * tn * itemsize + 2 * scale_block_bytes
    # Generous margin for Mosaic internal scratch; never below the 16 MiB
    # default so we can't make compilation harder than stock.
    return int(min(100 * 1024 * 1024, max(16 * 1024 * 1024, data + 8 * 1024 * 1024)))


# ---------------------------------------------------------------------------
# Wrapper
# ---------------------------------------------------------------------------

# Only these (known purely-elementwise) activations are fused in-kernel; the
# kernel applies act per (TM, TN) block of a reshaped view, which is only
# valid for elementwise functions.
_ELEMENTWISE_ACTS = (
    jax.nn.relu, jax.nn.relu6, jax.nn.sigmoid, jax.nn.silu, jax.nn.gelu,
    jax.nn.softplus, jax.nn.elu, jax.nn.leaky_relu, jnp.tanh, jnp.abs,
)


def conv_aftermath(x_nchw, b, s, *, use_bias=True, use_scale=True,
                   norm=None, act=None, act_is_elementwise=None):
    """Pallas implementation of ConvAftermath.forward.

    x_nchw: (N, C, H, W) input.
    b, s:   per-channel parameters of shape (C,) or None (module init leaves
            them None, in which case the corresponding branch is skipped).
    act_is_elementwise: force-enable in-kernel act fusion for activations not
            in the built-in whitelist (must be purely elementwise).
    """
    N, C, H, W = x_nchw.shape
    dtype = x_nchw.dtype
    itemsize = dtype.itemsize
    HW = H * W

    # Exact PyTorch branch logic: adds the *flag*, never reads tensor b.
    add_val = float(use_bias) if (use_bias and b is not None) else None
    do_scale = bool(use_scale) and (s is not None)

    if act_is_elementwise is None:
        act_is_elementwise = any(act is f for f in _ELEMENTWISE_ACTS)
    fused_act = act if (act is not None and norm is None and act_is_elementwise) else None

    budget = _data_budget_bytes()

    if do_scale and HW % _LANE == 0:
        # Layout A: (N*C, H*W); each row shares one channel scale -> cheap
        # (TM, 1) f32 column, re-DMA'd only when the row block changes.
        rows, cols = N * C, HW
        x2d = x_nchw.reshape(rows, cols)
        tm, tn = _choose_tiles(rows, cols, itemsize, budget)
        tm, tn = _ensure_grid_splits(tm, tn, rows, cols, itemsize)
        s_aux = jnp.broadcast_to(s.astype(jnp.float32).reshape(1, C),
                                 (N, C)).reshape(rows, 1)
        s_spec = pl.BlockSpec((tm, 1), lambda i, j: (i, 0))
        scale_block_bytes = tm * 4
    elif do_scale:
        # Layout B: (N, C*H*W); lane-dense stores even when H*W % 128 != 0.
        # Scale pre-broadcast to a (1, C*H*W) f32 lane row, indexed by j.
        rows, cols = N, C * HW
        x2d = x_nchw.reshape(rows, cols)
        tm, tn = _choose_tiles(rows, cols, itemsize, budget)
        tm, tn = _ensure_grid_splits(tm, tn, rows, cols, itemsize)
        s_aux = jnp.broadcast_to(s.astype(jnp.float32).reshape(C, 1),
                                 (C, HW)).reshape(1, cols)
        s_spec = pl.BlockSpec((1, tn), lambda i, j: (0, j))
        scale_block_bytes = tn * 4
    else:
        # No per-channel scale: pick whichever 2D view keeps lanes dense.
        if HW % _LANE == 0:
            rows, cols = N * C, HW
        else:
            rows, cols = N, C * HW
        x2d = x_nchw.reshape(rows, cols)
        tm, tn = _choose_tiles(rows, cols, itemsize, budget)
        tm, tn = _ensure_grid_splits(tm, tn, rows, cols, itemsize)
        s_aux = None
        s_spec = None
        scale_block_bytes = 0

    grid = (pl.cdiv(rows, tm), pl.cdiv(cols, tn))
    data_spec = pl.BlockSpec((tm, tn), lambda i, j: (i, j))

    if do_scale:
        kernel = functools.partial(_aftermath_kernel_scaled,
                                   add_val=add_val, act_fn=fused_act)
        in_specs = [data_spec, s_spec]
        args = (x2d, s_aux)
    else:
        kernel = functools.partial(_aftermath_kernel_plain,
                                   add_val=add_val, act_fn=fused_act)
        in_specs = [data_spec]
        args = (x2d,)

    out2d = pl.pallas_call(
        kernel,
        out_shape=jax.ShapeDtypeStruct((rows, cols), dtype),
        grid=grid,
        in_specs=in_specs,
        out_specs=pl.BlockSpec((tm, tn), lambda i, j: (i, j)),
        # Pure elementwise map, identical shape/dtype -> safe to write in place.
        input_output_aliases={0: 0},
        compiler_params=pltpu.CompilerParams(
            dimension_semantics=("parallel", "parallel"),
            vmem_limit_bytes=_vmem_limit_bytes(tm, tn, itemsize, scale_block_bytes)),
    )(*args)

    net = out2d.reshape(N, C, H, W)
    if norm is not None:
        # TODO(synk): `norm` is an arbitrary nn.Module in PyTorch; no generic
        # Pallas equivalent, so it is applied as a plain-JAX callable here.
        net = norm(net)
    if act is not None and fused_act is None:
        net = act(net)   # preserves norm -> act ordering / non-elementwise acts
    return net


# ---------------------------------------------------------------------------
# Pure-JAX reference (mirrors PyTorch forward exactly)
# ---------------------------------------------------------------------------

def _reference(x, b, s, *, use_bias=True, use_scale=True, norm=None, act=None):
    net = x
    if use_bias and b is not None:
        net = net + float(use_bias)       # exact PyTorch behavior: adds the flag
    if use_scale and s is not None:
        net = net * s.reshape(1, -1, 1, 1)
    if norm is not None:
        net = norm(net)
    if act is not None:
        net = act(net)
    return net


if __name__ == "__main__":
    key = jax.random.PRNGKey(0)
    kx, kb, ks, kx2 = jax.random.split(key, 4)

    N, C, H, W = 2, 4, 16, 16
    x = jax.random.normal(kx, (N, C, H, W), dtype=jnp.float32)
    # Deterministic "externally assigned" per-channel parameters (the module
    # leaves them None in __init__; they only matter once set).
    b = jax.random.normal(kb, (C,), dtype=jnp.float32)
    s = jax.random.normal(ks, (C,), dtype=jnp.float32)

    # Case 1: bias-flag add + per-channel scale (HW % 128 == 0 -> layout A).
    out1 = jax.block_until_ready(conv_aftermath(x, b, s))
    ref1 = _reference(x, b, s)
    assert out1.shape == (N, C, H, W)
    assert jnp.allclose(out1, ref1, atol=1e-6, rtol=1e-6), "case 1 mismatch"

    # Case 2: fused elementwise activation (norm=None, whitelisted act).
    out2 = jax.block_until_ready(conv_aftermath(x, b, s, act=jax.nn.relu))
    ref2 = _reference(x, b, s, act=jax.nn.relu)
    assert jnp.allclose(out2, ref2, atol=1e-6, rtol=1e-6), "case 2 mismatch"

    # Case 3: scale parameter unset -> plain kernel path (no scale input).
    out3 = jax.block_until_ready(conv_aftermath(x, b, None))
    ref3 = _reference(x, b, None)
    assert jnp.allclose(out3, ref3, atol=1e-6, rtol=1e-6), "case 3 mismatch"

    # Case 4: H*W not a multiple of 128 -> lane-dense layout B ((N, C*H*W)).
    x_odd = jax.random.normal(kx2, (N, C, 15, 15), dtype=jnp.float32)
    out4 = jax.block_until_ready(conv_aftermath(x_odd, b, s, act=jax.nn.relu))
    ref4 = _reference(x_odd, b, s, act=jax.nn.relu)
    assert jnp.allclose(out4, ref4, atol=1e-6, rtol=1e-6), "case 4 mismatch"

    # Case 5: norm present + act -> act NOT fused; norm->act applied outside.
    norm_fn = lambda t: (t - t.mean(axis=(0, 2, 3), keepdims=True))
    out5 = jax.block_until_ready(
        conv_aftermath(x, b, s, norm=norm_fn, act=jax.nn.relu))
    ref5 = _reference(x, b, s, norm=norm_fn, act=jax.nn.relu)
    assert jnp.allclose(out5, ref5, atol=1e-5, rtol=1e-5), "case 5 mismatch"

    # Case 6: unknown (non-whitelisted) act -> applied outside the kernel.
    custom_act = lambda t: t * 0.5 + 1.0
    out6 = jax.block_until_ready(conv_aftermath(x, b, s, act=custom_act))
    ref6 = _reference(x, b, s, act=custom_act)
    assert jnp.allclose(out6, ref6, atol=1e-6, rtol=1e-6), "case 6 mismatch"

    print("KERNEL_OK")
</pallas_src>

<mosaic_0001>
module attributes {stable_mosaic.version = 11 : i64} {
  func.func @_aftermath_kernel_scaled(%arg0: i32, %arg1: i32, %arg2: memref<8x256xf32, #tpu.memory_space<vmem>>, %arg3: memref<8x1xf32, #tpu.memory_space<vmem>>, %arg4: memref<8x256xf32, #tpu.memory_space<vmem>>) attributes {dimension_semantics = [#tpu.dimension_semantics<parallel>, #tpu.dimension_semantics<parallel>], iteration_bounds = array<i64: 1, 1>, scalar_prefetch = 0 : i64, scratch_operands = 0 : i64, tpu.core_type = #tpu.core_type<tc>, window_params = [{transform_indices = @transform_0, window_bounds = array<i64: 8, 256>}, {transform_indices = @transform_1, window_bounds = array<i64: 8, 1>}, {transform_indices = @transform_2, window_bounds = array<i64: 8, 256>}]} {
    %c0 = arith.constant 0 : index
    %c0_0 = arith.constant 0 : index
    %0 = vector.load %arg2[%c0, %c0_0] : memref<8x256xf32, #tpu.memory_space<vmem>>, vector<8x256xf32>
    %cst = arith.constant 1.000000e+00 : f32
    %1 = vector.broadcast %cst : f32 to vector<8x256xf32>
    %2 = arith.addf %0, %1 : vector<8x256xf32>
    %c0_1 = arith.constant 0 : index
    %c0_2 = arith.constant 0 : index
    %3 = vector.load %arg3[%c0_1, %c0_2] : memref<8x1xf32, #tpu.memory_space<vmem>>, vector<8x1xf32>
    %4 = vector.broadcast %3 : vector<8x1xf32> to vector<8x256xf32>
    %5 = arith.mulf %2, %4 : vector<8x256xf32>
    %c0_3 = arith.constant 0 : index
    %c0_4 = arith.constant 0 : index
    %6 = vector.load %arg4[%c0_3, %c0_4] : memref<8x256xf32, #tpu.memory_space<vmem>>, vector<8x256xf32>
    tpu.vector_store %arg4[%c0_3, %c0_4], %5 {strides = array<i32>} : memref<8x256xf32, #tpu.memory_space<vmem>>, vector<8x256xf32>,
    return
  }
  func.func @transform_0(%arg0: i32, %arg1: i32) -> (i32, i32) {
    %c0_i32 = arith.constant 0 : i32
    return %arg0, %arg1 : i32, i32
  }
  func.func @transform_1(%arg0: i32, %arg1: i32) -> (i32, i32) {
    %c0_i32 = arith.constant 0 : i32
    %c0_i32_0 = arith.constant 0 : i32
    return %arg0, %c0_i32 : i32, i32
  }
  func.func @transform_2(%arg0: i32, %arg1: i32) -> (i32, i32) {
    %c0_i32 = arith.constant 0 : i32
    return %arg0, %arg1 : i32, i32
  }
}

</mosaic_0001>

<llo_original>
// kernel: tpu_custom_call.1
$region0: #{tpu_custom_call.1}
  #allocation0 [shape = 'u32[]', space=smem, size = 0x4, offset = 0x4, fixed_abs, tag = 'smem constant byte address 0x4 - core index']
  #allocation1 [shape = 'u32[144,128]{1,0:T(1,128)}', space=vmem, size = 0x12000, scoped, tag = 'internal scratch']
  %s0 = inlined_call_operand.hbm [shape: f32[8,256], index: 0, kind: input, shape index: {}, may-alias: {0,2}]
  %s1 = inlined_call_operand.vmem [shape: f32[8,1], index: 1, kind: input, shape index: {}]
  %s2 = inlined_call_operand.hbm [shape: f32[8,256], index: 2, kind: output, shape index: {}, may-alias: {0,2}]
  %s3 = sld [smem:[#allocation0]]
  $region22: #{tpu_custom_call.1} parent=0
    _
  %s5 = ssub.s32 1, %s3
  %s6 = scalar_select 0, %s5, %s3
  $region1: #{tpu_custom_call.1} parent=0
    #allocation2 [shape = 'u8[8192]{0}', space=vmem, size = 0x2000, scoped, tag = 'input window, operand 0, single buffered']
    #allocation3 [shape = 's32[1]{0}', space=sflag, size = 0x4, scoped, tag = 'scoped memory for tpu_custom_call.1']
    #allocation4 [shape = 's32[1]{0}', space=sflag, size = 0x4, scoped, tag = 'scoped memory for tpu_custom_call.1']
    #allocation5 [shape = 'u8[8192]{0}', space=vmem, size = 0x2000, scoped, tag = 'output window, operand 0, single buffered']
    %7 = vsyncpa [#allocation3], 0
    %8 = vsyncpa [#allocation4], 0
    // Predicated region
    $region2: #{tpu_custom_call.1} parent=1 // pred_check
      _
    $region3: #{tpu_custom_call.1} parent=1 // pred_check_branch
      %10 = sbr.rel (0) target = $region5
    $region4: #{tpu_custom_call.1} parent=1 // pred_region
      %s12 = ssub.s32 256, 256
      %13 = vsyncadd [#allocation3], %s12
      %s15 = sshll.u32 [#allocation2], 4
      %s16 = int_to_ptr.vmem [resolvable:$true] %s15
      %18 = dma.hbm_to_vmem [thread:$0]  %s0, 256, %s16, [#allocation3]
    $region5: #{tpu_custom_call.1} parent=1 // pred_fallthru
      _
    // Predicated region
    $region6: #{tpu_custom_call.1} parent=1 // pred_check
      _
    $region7: #{tpu_custom_call.1} parent=1 // pred_check_branch
      %20 = sbr.rel (0) target = $region9
    $region8: #{tpu_custom_call.1} parent=1 // pred_region
      _
    $region9: #{tpu_custom_call.1} parent=1 // pred_fallthru
      _
    // Predicated region
    $region10: #{tpu_custom_call.1} parent=1 // pred_check
      _
    $region11: #{tpu_custom_call.1} parent=1 // pred_check_branch
      %22 = sbr.rel (0) target = $region13
    $region12: #{tpu_custom_call.1} parent=1 // pred_region
      %23 = dma.done [#allocation3], 256
    $region13: #{tpu_custom_call.1} parent=1 // pred_fallthru
      _
    %v24 = vld [vmem:[#allocation2] sm:$0xff]
    %v25 = vld [vmem:[#allocation2 + $0x8] sm:$0xff]
    %v26 = vadd.f32 %v24, 1.0
    %v27 = vadd.f32 %v25, 1.0
    %v28 = vld [vmem:[%s1] sm:$0xff]
    %30 = vset.pattern.permute.xlu0 0
    %31 = vperm.xlu0 %30, %v28
    %v32 = vpop.permute.xlu0 %31
    %v34 = vmul.f32 %v26, %v32
    %v35 = vmul.f32 %v27, %v32
    %36 = vst [vmem:[#allocation5] sm:$0xff] %v34
    %37 = vst [vmem:[#allocation5 + $0x8] sm:$0xff] %v35
    // Predicated region
    $region14: #{tpu_custom_call.1} parent=1 // pred_check
      _
    $region15: #{tpu_custom_call.1} parent=1 // pred_check_branch
      %39 = sbr.rel (0) target = $region17
    $region16: #{tpu_custom_call.1} parent=1 // pred_region
      %s41 = ssub.s32 256, 256
      %42 = vsyncadd [#allocation4], %s41
      %s44 = sshll.u32 [#allocation5], 4
      %s45 = int_to_ptr.vmem [resolvable:$true] %s44
      %47 = dma.vmem_to_hbm [thread:$0]  %s45, 256, %s2, [#allocation4]
    $region17: #{tpu_custom_call.1} parent=1 // pred_fallthru
      _
    // Predicated region
    $region18: #{tpu_custom_call.1} parent=1 // pred_check
      _
    $region19: #{tpu_custom_call.1} parent=1 // pred_check_branch
      %49 = sbr.rel (0) target = $region21
    $region20: #{tpu_custom_call.1} parent=1 // pred_region
      %50 = dma.done [#allocation4], 256
    $region21: #{tpu_custom_call.1} parent=1 // pred_fallthru
      _
    %51 = vsyncpa [#allocation3], 1
    %52 = vsyncpa [#allocation4], 1

</llo_original>
